<compile_context>
chip_gen: v5e
topology: v5e:2x2
jax: 0.10.0
libtpu: 0.0.40
codegen_flags: <defaults>
</compile_context>

<pallas_src>
import functools
import math

import jax
import jax.numpy as jnp
import numpy as np
from jax.experimental import pallas as pl
from jax.experimental.pallas import tpu as pltpu


# ----------------------------- kernel helpers --------------------------------


def _conv_abs_feat(d3_ref, w3_ref, *, img_w):
    """|3x3 SAME conv| on one lane tile of the scaled difference image.

    d3_ref: (3C, THW) f32 -- rows ordered (kh, c); lanes = flattened (h, w),
            already vertically shifted / zero padded per kh in the wrapper.
    w3_ref: (3, F, 3C) f32 -- w3[kw, f, kh*C + c] = weight[f, c, kh, kw] * 255.
    Requires THW % img_w == 0 so every lane-roll wrap point lands on an image
    column boundary (which SAME padding zeroes anyway).
    Returns |feat| of shape (F, THW) f32.
    """
    d3 = d3_ref[...]
    thw = d3.shape[-1]
    col = jax.lax.broadcasted_iota(jnp.int32, (1, thw), 1) % img_w
    left_ok = (col != 0).astype(jnp.float32)           # kw=0 tap validity
    right_ok = (col != img_w - 1).astype(jnp.float32)  # kw=2 tap validity

    # kw = 1 (same column): no shift, no mask.
    feat = jnp.dot(w3_ref[1], d3, preferred_element_type=jnp.float32)
    # kw = 0 (left neighbour): roll lanes right by 1, kill image column 0.
    feat += jnp.dot(w3_ref[0], pltpu.roll(d3, shift=1, axis=1),
                    preferred_element_type=jnp.float32) * left_ok
    # kw = 2 (right neighbour): roll lanes left by 1, kill image column W-1.
    feat += jnp.dot(w3_ref[2], pltpu.roll(d3, shift=thw - 1, axis=1),
                    preferred_element_type=jnp.float32) * right_ok
    return jnp.abs(feat)


def _loss_kernel_nomask(d3_ref, w3_ref, out_ref, acc_ref, *, img_w):
    i = pl.program_id(0)

    @pl.when(i == 0)
    def _():
        acc_ref[...] = jnp.zeros_like(acc_ref)

    acc_ref[...] += _conv_abs_feat(d3_ref, w3_ref, img_w=img_w)

    @pl.when(i == pl.num_programs(0) - 1)
    def _():
        out_ref[0, 0] = jnp.sum(acc_ref[...])


def _loss_kernel_mask(d3_ref, w3_ref, m_ref, out_ref, acc_ref, *, img_w):
    i = pl.program_id(0)

    @pl.when(i == 0)
    def _():
        acc_ref[...] = jnp.zeros_like(acc_ref)

    acc_ref[...] += _conv_abs_feat(d3_ref, w3_ref, img_w=img_w) * m_ref[...]

    @pl.when(i == pl.num_programs(0) - 1)
    def _():
        out_ref[0, 0] = jnp.sum(acc_ref[...])


# ----------------------------- wrapper ---------------------------------------


def _vertical_taps(d):
    """(C, H, W) -> (3C, H*W): rows (kh, c) are zero-padded vertical shifts."""
    C, H, W = d.shape
    dp = jnp.pad(d, ((0, 0), (1, 1), (0, 0)))
    return jnp.concatenate([dp[:, kh:kh + H, :] for kh in range(3)],
                           axis=0).reshape(3 * C, H * W)


def _pick_tile(hw, w, max_lanes):
    """Largest THW <= max_lanes with THW | hw, W | THW and 128 | THW (else hw)."""
    if hw <= max_lanes:
        return hw
    step = (128 * w) // math.gcd(128, w)  # lcm(128, W)
    t = (max_lanes // step) * step
    while t >= step:
        if hw % t == 0:
            return t
        t -= step
    return hw  # fallback: whole image in one step


def base_perceptual_loss(preds, targets, weight_oihw, mask=None, *,
                         max_lanes=2048):
    """preds, targets: (C, H, W) float32.  weight_oihw: (F, C, 3, 3).
    mask: optional (1, 1, H, W).  Returns scalar f32 loss."""
    C, H, W = targets.shape
    F_out = weight_oihw.shape[0]
    HW = H * W

    # Linearity: conv(p*255) - conv(t*255) == conv_{255*w}(p - t), so only the
    # difference image is expanded (3C rows, not 2 * 9C) and DMA'd.
    d = preds.astype(jnp.float32) - targets.astype(jnp.float32)
    d3 = _vertical_taps(d)                               # (3C, HW)

    # Tiny per-kw weight slabs with the module's *255 folded in.
    w3 = (jnp.transpose(weight_oihw.astype(jnp.float32), (3, 0, 2, 1))
          .reshape(3, F_out, 3 * C) * jnp.float32(255.0))  # (3, F, 3C)

    thw = _pick_tile(HW, W, max_lanes)
    grid = (HW // thw,)

    d3_spec = pl.BlockSpec((3 * C, thw), lambda i: (0, i))
    w3_spec = pl.BlockSpec((3, F_out, 3 * C), lambda i: (0, 0, 0))
    out_spec = pl.BlockSpec((1, 1), lambda i: (0, 0),
                            memory_space=pltpu.MemorySpace.SMEM)
    out_shape = jax.ShapeDtypeStruct((1, 1), jnp.float32)
    scratch = [pltpu.VMEM((F_out, thw), jnp.float32)]
    cparams = pltpu.CompilerParams(dimension_semantics=("arbitrary",))

    if mask is None:
        kernel = functools.partial(_loss_kernel_nomask, img_w=W)
        num = pl.pallas_call(
            kernel,
            grid=grid,
            out_shape=out_shape,
            in_specs=[d3_spec, w3_spec],
            out_specs=out_spec,
            scratch_shapes=scratch,
            compiler_params=cparams,
        )(d3, w3)[0, 0]
        # Matches: mask = ones((1,1,H,W))  ->  sum(mask) == H*W.
        den = jnp.float32(float(HW) * float(F_out) + 1e-8)
    else:
        m_flat = mask.reshape(1, HW).astype(jnp.float32)
        m_spec = pl.BlockSpec((1, thw), lambda i: (0, i))
        kernel = functools.partial(_loss_kernel_mask, img_w=W)
        num = pl.pallas_call(
            kernel,
            grid=grid,
            out_shape=out_shape,
            in_specs=[d3_spec, w3_spec, m_spec],
            out_specs=out_spec,
            scratch_shapes=scratch,
            compiler_params=cparams,
        )(d3, w3, m_flat)[0, 0]
        den = jnp.sum(m_flat) * jnp.float32(F_out) + jnp.float32(1e-8)

    return num / den


# ----------------------------- reference -------------------------------------


def _reference_loss(preds, targets, weight_oihw, mask):
    """Plain-JAX reference of the same synthetic net (correctness check)."""
    x = preds[None] * 255.0
    y = targets[None] * 255.0
    dn = ("NCHW", "OIHW", "NCHW")
    fx = jax.lax.conv_general_dilated(x, weight_oihw, (1, 1), "SAME",
                                      dimension_numbers=dn)[0]
    fy = jax.lax.conv_general_dilated(y, weight_oihw, (1, 1), "SAME",
                                      dimension_numbers=dn)[0]
    m = mask[0, 0]
    num = jnp.sum(jnp.abs(fx - fy) * m[None])
    den = jnp.sum(m) * weight_oihw.shape[0] + 1e-8
    return num / den


if __name__ == "__main__":
    C, H, W = 4, 16, 16
    F_OUT = 8

    key = jax.random.PRNGKey(0)
    k_p, k_t, k_m = jax.random.split(key, 3)
    preds = jax.random.uniform(k_p, (C, H, W), jnp.float32)
    targets = jax.random.uniform(k_t, (C, H, W), jnp.float32)

    # Deterministic synthetic conv weights (stand-in for the perceptual net).
    weight = jax.random.normal(jax.random.PRNGKey(42),
                               (F_OUT, C, 3, 3), jnp.float32) * 0.1

    ones_mask = jnp.ones((1, 1, H, W), jnp.float32)
    mask = (jax.random.uniform(k_m, (1, 1, H, W)) > 0.3).astype(jnp.float32)

    # Path 1: mask=None (module builds a ones mask), single grid step.
    loss = jax.block_until_ready(base_perceptual_loss(preds, targets, weight))
    ref = _reference_loss(preds, targets, weight, ones_mask)
    np.testing.assert_allclose(np.asarray(loss), np.asarray(ref),
                               rtol=2e-3, atol=2e-3)

    # Path 2: explicit mask, single grid step.
    loss_m = jax.block_until_ready(
        base_perceptual_loss(preds, targets, weight, mask=mask))
    ref_m = _reference_loss(preds, targets, weight, mask)
    np.testing.assert_allclose(np.asarray(loss_m), np.asarray(ref_m),
                               rtol=2e-3, atol=2e-3)

    # Paths 3/4: force a multi-step grid (max_lanes=128 -> 2 lane tiles) to
    # exercise the resident-accumulator init / accumulate / finalize path.
    loss_t = jax.block_until_ready(
        base_perceptual_loss(preds, targets, weight, max_lanes=128))
    np.testing.assert_allclose(np.asarray(loss_t), np.asarray(ref),
                               rtol=2e-3, atol=2e-3)
    loss_tm = jax.block_until_ready(
        base_perceptual_loss(preds, targets, weight, mask=mask, max_lanes=128))
    np.testing.assert_allclose(np.asarray(loss_tm), np.asarray(ref_m),
                               rtol=2e-3, atol=2e-3)

    print("KERNEL_OK")
</pallas_src>

<mosaic_0001>
module attributes {stable_mosaic.version = 11 : i64} {
  func.func @_loss_kernel_nomask(%arg0: i32, %arg1: memref<12x256xf32, #tpu.memory_space<vmem>>, %arg2: memref<3x8x12xf32, #tpu.memory_space<vmem>>, %arg3: memref<1x1xf32, #tpu.memory_space<smem>>, %arg4: memref<8x256xf32, #tpu.memory_space<vmem>>) attributes {dimension_semantics = [#tpu.dimension_semantics<arbitrary>], iteration_bounds = array<i64: 1>, scalar_prefetch = 0 : i64, scratch_operands = 1 : i64, tpu.core_type = #tpu.core_type<tc>, window_params = [{transform_indices = @transform_0, window_bounds = array<i64: 12, 256>}, {pipeline_mode = #tpu.pipeline_mode<synchronous>, transform_indices = @transform_1, window_bounds = array<i64: 3, 8, 12>}, {transform_indices = @transform_2, window_bounds = array<i64: 1, 1>}]} {
    %c0_i32 = arith.constant 0 : i32
    %0 = arith.cmpi eq, %arg0, %c0_i32 : i32
    %1 = arith.extui %0 : i1 to i32
    %c0_i32_0 = arith.constant 0 : i32
    %2 = arith.cmpi ne, %1, %c0_i32_0 : i32
    scf.if %2 {
      %cst_23 = arith.constant 0.000000e+00 : f32
      %53 = vector.broadcast %cst_23 : f32 to vector<8x256xf32>
      %c0_24 = arith.constant 0 : index
      %c0_25 = arith.constant 0 : index
      %54 = vector.load %arg4[%c0_24, %c0_25] : memref<8x256xf32, #tpu.memory_space<vmem>>, vector<8x256xf32>
      tpu.vector_store %arg4[%c0_24, %c0_25], %53 {strides = array<i32>} : memref<8x256xf32, #tpu.memory_space<vmem>>, vector<8x256xf32>,
    } else {
    }
    %c0 = arith.constant 0 : index
    %c0_1 = arith.constant 0 : index
    %3 = vector.load %arg4[%c0, %c0_1] : memref<8x256xf32, #tpu.memory_space<vmem>>, vector<8x256xf32>
    %c0_2 = arith.constant 0 : index
    %c0_3 = arith.constant 0 : index
    %4 = vector.load %arg1[%c0_2, %c0_3] : memref<12x256xf32, #tpu.memory_space<vmem>>, vector<12x256xf32>
    %5 = tpu.iota {dimensions = array<i32: 1>} : vector<1x256xi32>
    %c16_i32 = arith.constant 16 : i32
    %c0_i32_4 = arith.constant 0 : i32
    %6 = arith.cmpi eq, %c16_i32, %c0_i32_4 : i32
    %c1_i32 = arith.constant 1 : i32
    %7 = arith.select %6, %c1_i32, %c16_i32 : i32
    %8 = vector.broadcast %7 : i32 to vector<1x256xi32>
    %9 = arith.remsi %5, %8 : vector<1x256xi32>
    %c0_i32_5 = arith.constant 0 : i32
    %10 = vector.broadcast %c0_i32_5 : i32 to vector<1x256xi32>
    %11 = arith.cmpi ne, %9, %10 : vector<1x256xi32>
    %c0_i32_6 = arith.constant 0 : i32
    %12 = vector.broadcast %c0_i32_6 : i32 to vector<1x256xi32>
    %13 = arith.cmpi slt, %9, %12 : vector<1x256xi32>
    %c0_i32_7 = arith.constant 0 : i32
    %14 = arith.cmpi slt, %7, %c0_i32_7 : i32
    %15 = vector.broadcast %14 : i1 to vector<1x256xi1>
    %16 = vector.broadcast %15 : vector<1x256xi1> to vector<1x256xi1>
    %17 = arith.xori %13, %16 : vector<1x256xi1>
    %18 = arith.andi %17, %11 : vector<1x256xi1>
    %19 = vector.broadcast %7 : i32 to vector<1x256xi32>
    %20 = arith.addi %9, %19 : vector<1x256xi32>
    %21 = arith.select %18, %20, %9 : vector<1x256xi1>, vector<1x256xi32>
    %c0_i32_8 = arith.constant 0 : i32
    %22 = vector.broadcast %c0_i32_8 : i32 to vector<1x256xi32>
    %23 = arith.cmpi ne, %21, %22 : vector<1x256xi32>
    %24 = arith.extui %23 : vector<1x256xi1> to vector<1x256xi32>
    %25 = arith.sitofp %24 : vector<1x256xi32> to vector<1x256xf32>
    %c15_i32 = arith.constant 15 : i32
    %26 = vector.broadcast %c15_i32 : i32 to vector<1x256xi32>
    %27 = arith.cmpi ne, %21, %26 : vector<1x256xi32>
    %28 = arith.extui %27 : vector<1x256xi1> to vector<1x256xi32>
    %29 = arith.sitofp %28 : vector<1x256xi32> to vector<1x256xf32>
    %c1 = arith.constant 1 : index
    %c0_9 = arith.constant 0 : index
    %c0_10 = arith.constant 0 : index
    %30 = vector.load %arg2[%c1, %c0_9, %c0_10] : memref<3x8x12xf32, #tpu.memory_space<vmem>>, vector<1x8x12xf32>
    %31 = vector.shape_cast %30 : vector<1x8x12xf32> to vector<8x12xf32>
    %cst = arith.constant dense<0.000000e+00> : vector<8x256xf32>
    %32 = tpu.matmul %31, %4, %cst {dimension_numbers = #tpu.dot_dimension_numbers<[1], [0], [0], [1], [0, 0, 1, 1], [], []>} : vector<8x12xf32>, vector<12x256xf32>, vector<8x256xf32> -> vector<8x256xf32>
    %c0_11 = arith.constant 0 : index
    %c0_12 = arith.constant 0 : index
    %c0_13 = arith.constant 0 : index
    %33 = vector.load %arg2[%c0_11, %c0_12, %c0_13] : memref<3x8x12xf32, #tpu.memory_space<vmem>>, vector<1x8x12xf32>
    %34 = vector.shape_cast %33 : vector<1x8x12xf32> to vector<8x12xf32>
    %c1_i32_14 = arith.constant 1 : i32
    %35 = tpu.dynamic_rotate %4 by %c1_i32_14 dim 1 : vector<12x256xf32>, i32 -> vector<12x256xf32>
    %cst_15 = arith.constant dense<0.000000e+00> : vector<8x256xf32>
    %36 = tpu.matmul %34, %35, %cst_15 {dimension_numbers = #tpu.dot_dimension_numbers<[1], [0], [0], [1], [0, 0, 1, 1], [], []>} : vector<8x12xf32>, vector<12x256xf32>, vector<8x256xf32> -> vector<8x256xf32>
    %37 = vector.broadcast %25 : vector<1x256xf32> to vector<8x256xf32>
    %38 = arith.mulf %36, %37 : vector<8x256xf32>
    %39 = arith.addf %32, %38 : vector<8x256xf32>
    %c2 = arith.constant 2 : index
    %c0_16 = arith.constant 0 : index
    %c0_17 = arith.constant 0 : index
    %40 = vector.load %arg2[%c2, %c0_16, %c0_17] : memref<3x8x12xf32, #tpu.memory_space<vmem>>, vector<1x8x12xf32>
    %41 = vector.shape_cast %40 : vector<1x8x12xf32> to vector<8x12xf32>
    %c255_i32 = arith.constant 255 : i32
    %42 = tpu.dynamic_rotate %4 by %c255_i32 dim 1 : vector<12x256xf32>, i32 -> vector<12x256xf32>
    %cst_18 = arith.constant dense<0.000000e+00> : vector<8x256xf32>
    %43 = tpu.matmul %41, %42, %cst_18 {dimension_numbers = #tpu.dot_dimension_numbers<[1], [0], [0], [1], [0, 0, 1, 1], [], []>} : vector<8x12xf32>, vector<12x256xf32>, vector<8x256xf32> -> vector<8x256xf32>
    %44 = vector.broadcast %29 : vector<1x256xf32> to vector<8x256xf32>
    %45 = arith.mulf %43, %44 : vector<8x256xf32>
    %46 = arith.addf %39, %45 : vector<8x256xf32>
    %47 = math.absf %46 : vector<8x256xf32>
    %48 = arith.addf %3, %47 : vector<8x256xf32>
    %c0_19 = arith.constant 0 : index
    %c0_20 = arith.constant 0 : index
    %49 = vector.load %arg4[%c0_19, %c0_20] : memref<8x256xf32, #tpu.memory_space<vmem>>, vector<8x256xf32>
    tpu.vector_store %arg4[%c0_19, %c0_20], %48 {strides = array<i32>} : memref<8x256xf32, #tpu.memory_space<vmem>>, vector<8x256xf32>,
    %c0_i32_21 = arith.constant 0 : i32
    %50 = arith.cmpi eq, %arg0, %c0_i32_21 : i32
    %51 = arith.extui %50 : i1 to i32
    %c0_i32_22 = arith.constant 0 : i32
    %52 = arith.cmpi ne, %51, %c0_i32_22 : i32
    scf.if %52 {
      %c0_23 = arith.constant 0 : index
      %c0_24 = arith.constant 0 : index
      %53 = vector.load %arg4[%c0_23, %c0_24] : memref<8x256xf32, #tpu.memory_space<vmem>>, vector<8x256xf32>
      %54 = vector.shape_cast %53 : vector<8x256xf32> to vector<1x8x256xf32>
      %cst_25 = arith.constant dense<0.000000e+00> : vector<1xf32>
      %55 = vector.multi_reduction <add>, %54, %cst_25 [1, 2] : vector<1x8x256xf32> to vector<1xf32>
      %56 = vector.shape_cast %55 : vector<1xf32> to vector<1x1x1xf32>
      %57 = vector.extract %56[0, 0, 0] : f32 from vector<1x1x1xf32>
      %c0_26 = arith.constant 0 : index
      %c0_27 = arith.constant 0 : index
      %58 = memref.load %arg3[%c0_26, %c0_27] : memref<1x1xf32, #tpu.memory_space<smem>>
      memref.store %57, %arg3[%c0_26, %c0_27] : memref<1x1xf32, #tpu.memory_space<smem>>
    } else {
    }
    return
  }
  func.func @transform_0(%arg0: i32) -> (i32, i32) {
    %c0_i32 = arith.constant 0 : i32
    %c0_i32_0 = arith.constant 0 : i32
    return %c0_i32, %arg0 : i32, i32
  }
  func.func @transform_1(%arg0: i32) -> (i32, i32, i32) {
    %c0_i32 = arith.constant 0 : i32
    %c0_i32_0 = arith.constant 0 : i32
    %c0_i32_1 = arith.constant 0 : i32
    %c0_i32_2 = arith.constant 0 : i32
    return %c0_i32, %c0_i32_0, %c0_i32_1 : i32, i32, i32
  }
  func.func @transform_2(%arg0: i32) -> (i32, i32) {
    %c0_i32 = arith.constant 0 : i32
    %c0_i32_0 = arith.constant 0 : i32
    %c0_i32_1 = arith.constant 0 : i32
    return %c0_i32, %c0_i32_0 : i32, i32
  }
}

</mosaic_0001>

<llo_original>
// kernel: tpu_custom_call.1
$region0: #{tpu_custom_call.1}
  #allocation0 [shape = 'u32[]', space=smem, size = 0x4, offset = 0x4, fixed_abs, tag = 'smem constant byte address 0x4 - core index']
  #allocation1 [shape = 'u32[72,128]{1,0:T(1,128)}', space=vmem, size = 0x9000, scoped, tag = 'internal scratch']
  #allocation2 [shape = 'f32[8,256]{1,0:T(8,128)}', space=vmem, size = 0x2000, scoped, tag = 'scratch operand']
  %s0 = inlined_call_operand.hbm [shape: f32[12,256], index: 0, kind: input, shape index: {}]
  %s1 = inlined_call_operand.hbm [shape: f32[3,8,12], index: 1, kind: input, shape index: {}]
  %s2 = inlined_call_operand.hbm [shape: f32[1,1], index: 2, kind: output, shape index: {}]
  %s3 = sld [smem:[#allocation0]]
  $region34: #{tpu_custom_call.1} parent=0
    _
  %s5 = ssub.s32 1, %s3
  %s6 = scalar_select 0, %s5, %s3
  $region1: #{tpu_custom_call.1} parent=0
    #allocation3 [shape = 'u8[16384]{0}', space=vmem, size = 0x4000, scoped, tag = 'input window, operand 0, single buffered']
    #allocation4 [shape = 's32[1]{0}', space=sflag, size = 0x4, scoped, tag = 'scoped memory for tpu_custom_call.1']
    #allocation5 [shape = 's32[1]{0}', space=sflag, size = 0x4, scoped, tag = 'scoped memory for tpu_custom_call.1']
    #allocation6 [shape = 'u8[12288]{0}', space=vmem, size = 0x3000, scoped, tag = 'input window, operand 1, single buffered']
    #allocation7 [shape = 's32[1]{0}', space=sflag, size = 0x4, scoped, tag = 'scoped memory for tpu_custom_call.1']
    #allocation8 [shape = 'u8[512]{0}', space=smem, size = 0x200, scoped, tag = 'output window, operand 0, single buffered']
    %7 = vsyncpa [#allocation4], 0
    %8 = vsyncpa [#allocation7], 0
    %9 = vsyncpa [#allocation5], 0
    // Predicated region
    $region2: #{tpu_custom_call.1} parent=1 // pred_check
      _
    $region3: #{tpu_custom_call.1} parent=1 // pred_check_branch
      %11 = sbr.rel (0) target = $region5
    $region4: #{tpu_custom_call.1} parent=1 // pred_region
      %13 = vsyncadd [#allocation4], 0
      %s14 = sshll.u32 %s0, 4
      %s15 = int_to_ptr.hbm [resolvable:$true] %s14
      %s16 = sshll.u32 [#allocation3], 4
      %s17 = int_to_ptr.vmem [resolvable:$true] %s16
      %22 = dma.hbm_to_vmem [thread:$0]  %s15, 512, %s17, [#allocation4], 256, 256, 16
    $region5: #{tpu_custom_call.1} parent=1 // pred_fallthru
      _
    // Predicated region
    $region6: #{tpu_custom_call.1} parent=1 // pred_check
      _
    $region7: #{tpu_custom_call.1} parent=1 // pred_check_branch
      %24 = sbr.rel (0) target = $region9
    $region8: #{tpu_custom_call.1} parent=1 // pred_region
      %26 = vsyncadd [#allocation7], 0
      %s27 = sshll.u32 %s1, 4
      %s28 = int_to_ptr.hbm [resolvable:$true] %s27
      %s29 = sshll.u32 [#allocation6], 4
      %s30 = int_to_ptr.vmem [resolvable:$true] %s29
      %35 = dma.hbm_to_vmem [thread:$0]  %s28, 384, %s30, [#allocation7], 128, 128, 8
    $region9: #{tpu_custom_call.1} parent=1 // pred_fallthru
      _
    // Predicated region
    $region10: #{tpu_custom_call.1} parent=1 // pred_check
      _
    $region11: #{tpu_custom_call.1} parent=1 // pred_check_branch
      %37 = sbr.rel (0) target = $region13
    $region12: #{tpu_custom_call.1} parent=1 // pred_region
      %39 = dma.done [#allocation4], 512
    $region13: #{tpu_custom_call.1} parent=1 // pred_fallthru
      _
    // Predicated region
    $region14: #{tpu_custom_call.1} parent=1 // pred_check
      _
    $region15: #{tpu_custom_call.1} parent=1 // pred_check_branch
      %41 = sbr.rel (0) target = $region17
    $region16: #{tpu_custom_call.1} parent=1 // pred_region
      %43 = dma.done [#allocation7], 384
    $region17: #{tpu_custom_call.1} parent=1 // pred_fallthru
      _
    %p44 = scmp.eq.s32.totalorder 0, 0
    // Predicated region
    $region18: #{tpu_custom_call.1} parent=1 // pred_check
      %p45 = pneg %p44
    $region19: #{tpu_custom_call.1} parent=1 // pred_check_branch
      %47 = sbr.rel (%p45) target = $region21
    $region20: #{tpu_custom_call.1} parent=1 // pred_region
      %48 = vst [vmem:[#allocation2] sm:$0xff] 0.0
      %49 = vst [vmem:[#allocation2 + $0x8] sm:$0xff] 0.0
    $region21: #{tpu_custom_call.1} parent=1 // pred_fallthru
      _
    %v50 = vld [vmem:[#allocation2] sm:$0xff]
    %v51 = vld [vmem:[#allocation2 + $0x8] sm:$0xff]
    %v52 = vld [vmem:[#allocation3] sm:$0xff]
    %v53 = vld [vmem:[#allocation3 + $0x8] sm:$0xff]
    %v54 = vld [vmem:[#allocation3 + $0x10] sm:$0xf]
    %v55 = vld [vmem:[#allocation3 + $0x18] sm:$0xf]
    %v56 = vlaneseq
    %v57 = vand.u32 %v56, 127
    %v58 = vadd.s32 %v57, 128
    %vm59 = vcmp.lt.s32.totalorder %v57, 0
    %v60 = vsub.s32 0, %v57
    %v61 = vsel %vm59, %v60, %v57
    %v62 = vshrl.u32 %v61, 4
    %v63 = vand.u32 %v61, 15
    %v64 = vsub.s32 0, %v63
    %v65 = vsel %vm59, %v64, %v63
    %vm66 = vcmp.lt.s32.totalorder %v58, 0
    %v67 = vsub.s32 0, %v58
    %v68 = vsel %vm66, %v67, %v58
    %v69 = vshrl.u32 %v68, 4
    %v70 = vand.u32 %v68, 15
    %v71 = vsub.s32 0, %v70
    %v72 = vsel %vm66, %v71, %v70
    %vm73 = vcmp.ne.s32.totalorder %v65, 0
    %vm74 = vcmp.ne.s32.totalorder %v72, 0
    %vm75 = vcmp.lt.s32.totalorder %v65, 0
    %vm76 = vcmp.lt.s32.totalorder %v72, 0
    %vm77 = vmand %vm75, %vm73
    %vm78 = vmand %vm76, %vm74
    %v79 = vadd.s32 %v65, 16
    %v80 = vadd.s32 %v72, 16
    %v81 = vsel %vm77, %v79, %v65
    %v82 = vsel %vm78, %v80, %v72
    %vm83 = vcmp.ne.s32.totalorder %v81, 0
    %vm84 = vcmp.ne.s32.totalorder %v82, 0
    %v85 = vsel %vm83, 1, 0
    %v86 = vsel %vm84, 1, 0
    %v87 = vcvt.s32.f32 %v85
    %v88 = vcvt.s32.f32 %v86
    %vm89 = vcmp.ne.s32.totalorder %v81, 15
    %vm90 = vcmp.ne.s32.totalorder %v82, 15
    %v91 = vsel %vm89, 1, 0
    %v92 = vsel %vm90, 1, 0
    %v93 = vcvt.s32.f32 %v91
    %v94 = vcvt.s32.f32 %v92
    %s95 = scalar_lea.vmem [#allocation6], 8
    %v96 = vld [vmem:[%s95] sm:$0xff]
    %v97 = vld [vmem:[#allocation6] sm:$0xff]
    %98 = vrot.lane.b32.xlu0 %v52, 1
    %v99 = vpop.permute.xlu0 %98
    %100 = vrot.lane.b32.xlu0 %v54, 1
    %v101 = vpop.permute.xlu0 %100
    %102 = vrot.lane.b32.xlu0 %v53, 1
    %v103 = vpop.permute.xlu0 %102
    %104 = vrot.lane.b32.xlu0 %v55, 1
    %v105 = vpop.permute.xlu0 %104
    %vm106 = vcmp.lt.s32.totalorder %v57, 1
    %v107 = vsel %vm106, %v99, %v103
    %v108 = vsel %vm106, %v101, %v105
    %v109 = vsel %vm106, %v103, %v99
    %v110 = vsel %vm106, %v105, %v101
    %vm111 = vcmask 97280
    %v113 = vsel %vm111, %v97, 0
    %vm115 = vcmask 1043456
    %v117 = vsel %vm115, %v110, 0
    %v120 = vsel %vm115, %v108, 0
    %122 = vmatpush.msra.mxu0 0.0
    %123 = vmatpush.msra.mxu0 0.0
    %124 = vmatpush.msra.mxu0 0.0
    %125 = vmatpush.msra.mxu0 0.0
    %126 = vmatpush.msra.mxu0 0.0
    %127 = vmatpush.msra.mxu0 0.0
    %128 = vmatpush.msra.mxu0 0.0
    %129 = vmatpush.msra.mxu0 0.0
    %130 = vmatpush.msra.mxu0 0.0
    %131 = vmatpush.msra.mxu0 0.0
    %132 = vmatpush.msra.mxu0 0.0
    %133 = vmatpush.msra.mxu0 0.0
    %134 = vmatpush.msra.mxu0 0.0
    %135 = vmatpush.msra.mxu0 0.0
    %136 = vmatpush.msra.mxu0 %v117
    %137 = vmatpush.msra.mxu0 %v109
    %138 = vmatmul.f32.gmra.mxu0 %v113
    %v139 = vpop.f32.mrf.mxu0
    %v140 = vadd.f32 0.0, %v139
    %141 = vdwg.mxu0
    %142 = vmatpush.msra.mxu0 0.0
    %143 = vmatpush.msra.mxu0 0.0
    %144 = vmatpush.msra.mxu0 0.0
    %145 = vmatpush.msra.mxu0 0.0
    %146 = vmatpush.msra.mxu0 0.0
    %147 = vmatpush.msra.mxu0 0.0
    %148 = vmatpush.msra.mxu0 0.0
    %149 = vmatpush.msra.mxu0 0.0
    %150 = vmatpush.msra.mxu0 0.0
    %151 = vmatpush.msra.mxu0 0.0
    %152 = vmatpush.msra.mxu0 0.0
    %153 = vmatpush.msra.mxu0 0.0
    %154 = vmatpush.msra.mxu0 0.0
    %155 = vmatpush.msra.mxu0 0.0
    %156 = vmatpush.msra.mxu0 %v120
    %157 = vmatpush.msra.mxu0 %v107
    %158 = vmatmul.f32.gmra.mxu0 %v113
    %v159 = vpop.f32.mrf.mxu0
    %v160 = vadd.f32 0.0, %v159
    %161 = vdwg.mxu0
    %v162 = vmul.f32 %v140, %v87
    %v163 = vmul.f32 %v160, %v88
    %v165 = vsel %vm111, %v96, 0
    %v168 = vsel %vm115, %v54, 0
    %v171 = vsel %vm115, %v55, 0
    %173 = vmatpush.msra.mxu0 0.0
    %174 = vmatpush.msra.mxu0 0.0
    %175 = vmatpush.msra.mxu0 0.0
    %176 = vmatpush.msra.mxu0 0.0
    %177 = vmatpush.msra.mxu0 0.0
    %178 = vmatpush.msra.mxu0 0.0
    %179 = vmatpush.msra.mxu0 0.0
    %180 = vmatpush.msra.mxu0 0.0
    %181 = vmatpush.msra.mxu0 0.0
    %182 = vmatpush.msra.mxu0 0.0
    %183 = vmatpush.msra.mxu0 0.0
    %184 = vmatpush.msra.mxu0 0.0
    %185 = vmatpush.msra.mxu0 0.0
    %186 = vmatpush.msra.mxu0 0.0
    %187 = vmatpush.msra.mxu0 %v168
    %188 = vmatpush.msra.mxu0 %v52
    %189 = vmatmul.f32.gmra.mxu0 %v165
    %v190 = vpop.f32.mrf.mxu0
    %v191 = vadd.f32 %v162, %v190
    %192 = vdwg.mxu0
    %193 = vmatpush.msra.mxu0 0.0
    %194 = vmatpush.msra.mxu0 0.0
    %195 = vmatpush.msra.mxu0 0.0
    %196 = vmatpush.msra.mxu0 0.0
    %197 = vmatpush.msra.mxu0 0.0
    %198 = vmatpush.msra.mxu0 0.0
    %199 = vmatpush.msra.mxu0 0.0
    %200 = vmatpush.msra.mxu0 0.0
    %201 = vmatpush.msra.mxu0 0.0
    %202 = vmatpush.msra.mxu0 0.0
    %203 = vmatpush.msra.mxu0 0.0
    %204 = vmatpush.msra.mxu0 0.0
    %205 = vmatpush.msra.mxu0 0.0
    %206 = vmatpush.msra.mxu0 0.0
    %207 = vmatpush.msra.mxu0 %v171
    %208 = vmatpush.msra.mxu0 %v53
    %209 = vmatmul.f32.gmra.mxu0 %v165
    %v210 = vpop.f32.mrf.mxu0
    %v211 = vadd.f32 %v163, %v210
    %212 = vdwg.mxu0
    %s213 = scalar_lea.vmem [#allocation6], 16
    %v214 = vld [vmem:[%s213] sm:$0xff]
    %215 = vrot.lane.b32.xlu0 %v52, 127
    %v216 = vpop.permute.xlu0 %215
    %217 = vrot.lane.b32.xlu0 %v54, 127
    %v218 = vpop.permute.xlu0 %217
    %219 = vrot.lane.b32.xlu0 %v53, 127
    %v220 = vpop.permute.xlu0 %219
    %221 = vrot.lane.b32.xlu0 %v55, 127
    %v222 = vpop.permute.xlu0 %221
    %vm223 = vcmp.lt.s32.totalorder %v57, 127
    %v224 = vsel %vm223, %v216, %v220
    %v225 = vsel %vm223, %v218, %v222
    %v226 = vsel %vm223, %v220, %v216
    %v227 = vsel %vm223, %v222, %v218
    %v229 = vsel %vm111, %v214, 0
    %v232 = vsel %vm115, %v225, 0
    %v235 = vsel %vm115, %v227, 0
    %237 = vmatpush.msra.mxu0 0.0
    %238 = vmatpush.msra.mxu0 0.0
    %239 = vmatpush.msra.mxu0 0.0
    %240 = vmatpush.msra.mxu0 0.0
    %241 = vmatpush.msra.mxu0 0.0
    %242 = vmatpush.msra.mxu0 0.0
    %243 = vmatpush.msra.mxu0 0.0
    %244 = vmatpush.msra.mxu0 0.0
    %245 = vmatpush.msra.mxu0 0.0
    %246 = vmatpush.msra.mxu0 0.0
    %247 = vmatpush.msra.mxu0 0.0
    %248 = vmatpush.msra.mxu0 0.0
    %249 = vmatpush.msra.mxu0 0.0
    %250 = vmatpush.msra.mxu0 0.0
    %251 = vmatpush.msra.mxu0 %v232
    %252 = vmatpush.msra.mxu0 %v224
    %253 = vmatmul.f32.gmra.mxu0 %v229
    %v254 = vpop.f32.mrf.mxu0
    %v255 = vadd.f32 0.0, %v254
    %256 = vdwg.mxu0
    %257 = vmatpush.msra.mxu0 0.0
    %258 = vmatpush.msra.mxu0 0.0
    %259 = vmatpush.msra.mxu0 0.0
    %260 = vmatpush.msra.mxu0 0.0
    %261 = vmatpush.msra.mxu0 0.0
    %262 = vmatpush.msra.mxu0 0.0
    %263 = vmatpush.msra.mxu0 0.0
    %264 = vmatpush.msra.mxu0 0.0
    %265 = vmatpush.msra.mxu0 0.0
    %266 = vmatpush.msra.mxu0 0.0
    %267 = vmatpush.msra.mxu0 0.0
    %268 = vmatpush.msra.mxu0 0.0
    %269 = vmatpush.msra.mxu0 0.0
    %270 = vmatpush.msra.mxu0 0.0
    %271 = vmatpush.msra.mxu0 %v235
    %272 = vmatpush.msra.mxu0 %v226
    %273 = vmatmul.f32.gmra.mxu0 %v229
    %v274 = vpop.f32.mrf.mxu0
    %v275 = vadd.f32 0.0, %v274
    %276 = vdwg.mxu0
    %v277 = vmul.f32 %v255, %v93
    %v278 = vmul.f32 %v275, %v94
    %v279 = vadd.f32 %v191, %v277
    %v280 = vadd.f32 %v211, %v278
    %v281 = vand.u32 2147483647, %v279
    %v282 = vand.u32 2147483647, %v280
    %v283 = vadd.f32 %v50, %v281
    %v284 = vadd.f32 %v51, %v282
    %285 = vst [vmem:[#allocation2] sm:$0xff] %v283
    %286 = vst [vmem:[#allocation2 + $0x8] sm:$0xff] %v284
    // Predicated region
    $region22: #{tpu_custom_call.1} parent=1 // pred_check
      %p287 = pneg %p44
    $region23: #{tpu_custom_call.1} parent=1 // pred_check_branch
      %289 = sbr.rel (%p287) target = $region25
    $region24: #{tpu_custom_call.1} parent=1 // pred_region
      %v290 = vld [vmem:[#allocation2] sm:$0xff]
      %v291 = vld [vmem:[#allocation2 + $0x8] sm:$0xff]
      %v292 = vadd.f32 %v290, %v291
      %293 = vadd.xlane.f32.xlu0 %v292
      %v294 = vpop.xlane.xlu0 %293
      %v295 = vrot.slane %v294, 4
      %v296 = vadd.f32 %v294, %v295
      %v297 = vrot.slane %v296, 2
      %v298 = vadd.f32 %v296, %v297
      %v299 = vrot.slane %v298, 1
      %v300 = vadd.f32 %v298, %v299
      %s301 = vtos %v300
      %s302 = scalar_lea.smem [#allocation8], 0
      %303 = sst [smem:[%s302]] %s301
    $region25: #{tpu_custom_call.1} parent=1 // pred_fallthru
      _
    // Predicated region
    $region26: #{tpu_custom_call.1} parent=1 // pred_check
      _
    $region27: #{tpu_custom_call.1} parent=1 // pred_check_branch
      %305 = sbr.rel (0) target = $region29
    $region28: #{tpu_custom_call.1} parent=1 // pred_region
      %307 = vsyncadd [#allocation5], 0
      %s309 = sshll.u32 %s2, 4
      %s310 = int_to_ptr.hbm [resolvable:$true] %s309
      %312 = dma.smem_to_hbm [#allocation8], 16, %s310, [#allocation5]
    $region29: #{tpu_custom_call.1} parent=1 // pred_fallthru
      _
    // Predicated region
    $region30: #{tpu_custom_call.1} parent=1 // pred_check
      _
    $region31: #{tpu_custom_call.1} parent=1 // pred_check_branch
      %314 = sbr.rel (0) target = $region33
    $region32: #{tpu_custom_call.1} parent=1 // pred_region
      %316 = dma.done [#allocation5], 16
    $region33: #{tpu_custom_call.1} parent=1 // pred_fallthru
      _
    %317 = sfence
    %318 = vsyncpa [#allocation4], 1
    %319 = vsyncpa [#allocation7], 1
    %320 = vsyncpa [#allocation5], 1

</llo_original>
